<compile_context>
chip_gen: v7x
topology: tpu7x:2x2x1
jax: 0.10.0
libtpu: 0.0.40
codegen_flags: <defaults>
</compile_context>

<pallas_src>
import functools

import jax
import jax.numpy as jnp
from jax import lax
from jax.experimental import pallas as pl
from jax.experimental.pallas import tpu as pltpu


def gated_conv1d_kernel(x_ref, w_ref, b_ref, o_ref, *, K, C_out, L_out):
    # x_ref : (B_TILE, C_in, L_pad)   batch tile, length on the lane axis
    # w_ref : (2*C_out, K*C_in)       fused [conv; gate] weights, tap-major contraction
    # b_ref : (2*C_out, 1)            fused biases (column vector, broadcasts over L)
    # o_ref : (B_TILE, C_out, L_out)  PyTorch Conv1d output layout, lane axis = L_out
    w = w_ref[...]
    b = b_ref[...].astype(jnp.float32)
    b_tile = x_ref.shape[0]
    for n in range(b_tile):  # static unroll over the (small) batch tile
        x_n = x_ref[n]                                                   # (C_in, L_pad)
        # im2col along the contraction axis: row (k*C_in + ci) holds x[ci, l + k].
        xcol = jnp.concatenate([x_n[:, k:k + L_out] for k in range(K)], axis=0)
        # Single MXU push per batch element: conv and gate computed together.
        y = jnp.dot(w, xcol, preferred_element_type=jnp.float32) + b     # (2*C_out, L_out)
        conv = y[:C_out, :]
        gate = y[C_out:, :]
        o_ref[n] = (conv * jax.nn.sigmoid(gate)).astype(o_ref.dtype)     # fp32 epilogue


def gated_conv1d(x_ncl, w_conv, b_conv, w_gate, b_gate, *, padding=0,
                 batch_tile=None, compute_dtype=None):
    """x_ncl: (N, C_in, L) PyTorch layout. Returns (N, C_out, L_out) PyTorch layout."""
    N, C_in, L = x_ncl.shape
    C_out, _, K = w_conv.shape
    L_pad = L + 2 * padding
    L_out = L_pad - K + 1

    # Small batches: one grid step holding the whole batch (grid overhead was the
    # dominant cost).  For large N on v7x, pick batch_tile so the grid has an even
    # number of steps and keep dimension_semantics=("parallel",) for the 2 TCs.
    if batch_tile is None:
        batch_tile = N
    assert N % batch_tile == 0
    num_tiles = N // batch_tile

    # Activations keep the PyTorch (N, C, L) layout: L lives on the lane axis for
    # both input and output, and no wrapper transposes of activations are needed.
    x_pad = jnp.pad(x_ncl, ((0, 0), (0, 0), (padding, padding)))         # (N, C_in, L_pad)

    # Fused weights: out[co, l] = sum_{k, ci} w[co, ci, k] * x[ci, l + k]
    # -> flatten weights as (co, k*C_in + ci) to match the im2col row order.
    wc_flat = jnp.transpose(w_conv, (0, 2, 1)).reshape(C_out, K * C_in)
    wg_flat = jnp.transpose(w_gate, (0, 2, 1)).reshape(C_out, K * C_in)
    w_fused = jnp.concatenate([wc_flat, wg_flat], axis=0)                # (2*C_out, K*C_in)
    b_fused = jnp.concatenate([b_conv, b_gate]).reshape(2 * C_out, 1)    # (2*C_out, 1)

    if compute_dtype is not None:  # e.g. jnp.bfloat16 on v6e/v7x at larger channel counts
        x_pad = x_pad.astype(compute_dtype)
        w_fused = w_fused.astype(compute_dtype)

    kernel = functools.partial(gated_conv1d_kernel, K=K, C_out=C_out, L_out=L_out)

    return pl.pallas_call(
        kernel,
        out_shape=jax.ShapeDtypeStruct((N, C_out, L_out), x_ncl.dtype),
        grid=(num_tiles,),
        in_specs=[
            pl.BlockSpec((batch_tile, C_in, L_pad), lambda i: (i, 0, 0)),
            pl.BlockSpec((2 * C_out, K * C_in), lambda i: (0, 0)),
            pl.BlockSpec((2 * C_out, 1), lambda i: (0, 0)),
        ],
        out_specs=pl.BlockSpec((batch_tile, C_out, L_out), lambda i: (i, 0, 0)),
        compiler_params=pltpu.CompilerParams(dimension_semantics=("parallel",)),
    )(x_pad, w_fused, b_fused)


def _reference(x_ncl, w_conv, b_conv, w_gate, b_gate, *, padding=0):
    """Pure-JAX reference mirroring torch.nn.Conv1d semantics."""
    def conv(x, w, b):
        y = lax.conv_general_dilated(
            x, w, window_strides=(1,), padding=[(padding, padding)],
            dimension_numbers=("NCH", "OIH", "NCH"))
        return y + b[None, :, None]
    c = conv(x_ncl, w_conv, b_conv)
    g = jax.nn.sigmoid(conv(x_ncl, w_gate, b_gate))
    return c * g


if __name__ == "__main__":
    # GatedConv1d(4 -> 8, kernel_size=3, padding=1), deterministic synthetic init.
    # TODO(synk): the remaining CNNAttnLSTM stages (BatchNorm, DualAttention,
    # TemporalAttention, bidirectional LSTM, residual MLP head) are not kernelized here.
    N, C_in, C_out, K, L, padding = 2, 4, 8, 3, 16, 1

    key = jax.random.PRNGKey(0)
    kx, kwc, kbc, kwg, kbg = jax.random.split(key, 5)

    # PyTorch-style uniform init bound = 1/sqrt(C_in * K)
    bound = 1.0 / jnp.sqrt(jnp.float32(C_in * K))
    x = jax.random.normal(kx, (N, C_in, L), dtype=jnp.float32)
    w_conv = jax.random.uniform(kwc, (C_out, C_in, K), jnp.float32, -bound, bound)
    b_conv = jax.random.uniform(kbc, (C_out,), jnp.float32, -bound, bound)
    w_gate = jax.random.uniform(kwg, (C_out, C_in, K), jnp.float32, -bound, bound)
    b_gate = jax.random.uniform(kbg, (C_out,), jnp.float32, -bound, bound)

    out = gated_conv1d(x, w_conv, b_conv, w_gate, b_gate, padding=padding)
    out = jax.block_until_ready(out)

    ref = _reference(x, w_conv, b_conv, w_gate, b_gate, padding=padding)
    assert out.shape == (N, C_out, L + 2 * padding - K + 1), out.shape
    assert jnp.allclose(out, ref, atol=1e-5, rtol=1e-5), float(jnp.max(jnp.abs(out - ref)))

    print("KERNEL_OK")
</pallas_src>

<mosaic_0001>
module attributes {stable_mosaic.version = 11 : i64} {
  func.func @gated_conv1d_kernel(%arg0: i32, %arg1: memref<2x4x18xf32, #tpu.memory_space<vmem>>, %arg2: memref<16x12xf32, #tpu.memory_space<vmem>>, %arg3: memref<16x1xf32, #tpu.memory_space<vmem>>, %arg4: memref<2x8x16xf32, #tpu.memory_space<vmem>>) attributes {dimension_semantics = [#tpu.dimension_semantics<parallel>], iteration_bounds = array<i64: 1>, scalar_prefetch = 0 : i64, scratch_operands = 0 : i64, tpu.core_type = #tpu.core_type<tc>, window_params = [{transform_indices = @transform_0, window_bounds = array<i64: 2, 4, 18>}, {pipeline_mode = #tpu.pipeline_mode<synchronous>, transform_indices = @transform_1, window_bounds = array<i64: 16, 12>}, {pipeline_mode = #tpu.pipeline_mode<synchronous>, transform_indices = @transform_2, window_bounds = array<i64: 16, 1>}, {transform_indices = @transform_3, window_bounds = array<i64: 2, 8, 16>}]} {
    %c0 = arith.constant 0 : index
    %c0_0 = arith.constant 0 : index
    %0 = vector.load %arg2[%c0, %c0_0] : memref<16x12xf32, #tpu.memory_space<vmem>>, vector<16x12xf32>
    %c0_1 = arith.constant 0 : index
    %c0_2 = arith.constant 0 : index
    %1 = vector.load %arg3[%c0_1, %c0_2] : memref<16x1xf32, #tpu.memory_space<vmem>>, vector<16x1xf32>
    %c0_3 = arith.constant 0 : index
    %c0_4 = arith.constant 0 : index
    %c0_5 = arith.constant 0 : index
    %2 = vector.load %arg1[%c0_3, %c0_4, %c0_5] : memref<2x4x18xf32, #tpu.memory_space<vmem>>, vector<1x4x18xf32>
    %3 = vector.shape_cast %2 : vector<1x4x18xf32> to vector<4x18xf32>
    %4 = vector.extract_strided_slice %3 {offsets = [0, 0], sizes = [4, 16], strides = [1, 1]} : vector<4x18xf32> to vector<4x16xf32>
    %5 = vector.extract_strided_slice %3 {offsets = [0, 1], sizes = [4, 16], strides = [1, 1]} : vector<4x18xf32> to vector<4x16xf32>
    %6 = vector.extract_strided_slice %3 {offsets = [0, 2], sizes = [4, 16], strides = [1, 1]} : vector<4x18xf32> to vector<4x16xf32>
    %7 = tpu.concatenate %4, %5, %6 in 0 : vector<4x16xf32>, vector<4x16xf32>, vector<4x16xf32> -> vector<12x16xf32>
    %cst = arith.constant dense<0.000000e+00> : vector<16x16xf32>
    %8 = tpu.matmul %0, %7, %cst {dimension_numbers = #tpu.dot_dimension_numbers<[1], [0], [0], [1], [0, 0, 1, 1], [], []>} : vector<16x12xf32>, vector<12x16xf32>, vector<16x16xf32> -> vector<16x16xf32>
    %9 = vector.broadcast %1 : vector<16x1xf32> to vector<16x16xf32>
    %10 = arith.addf %8, %9 : vector<16x16xf32>
    %11 = vector.extract_strided_slice %10 {offsets = [0, 0], sizes = [8, 16], strides = [1, 1]} : vector<16x16xf32> to vector<8x16xf32>
    %12 = vector.extract_strided_slice %10 {offsets = [8, 0], sizes = [8, 16], strides = [1, 1]} : vector<16x16xf32> to vector<8x16xf32>
    %13 = arith.negf %12 : vector<8x16xf32>
    %14 = math.exp %13 : vector<8x16xf32>
    %cst_6 = arith.constant 1.000000e+00 : f32
    %15 = vector.broadcast %cst_6 : f32 to vector<8x16xf32>
    %16 = arith.addf %15, %14 : vector<8x16xf32>
    %17 = arith.divf %15, %16 : vector<8x16xf32>
    %18 = arith.mulf %11, %17 : vector<8x16xf32>
    %c0_7 = arith.constant 0 : index
    %c0_8 = arith.constant 0 : index
    %c0_9 = arith.constant 0 : index
    %19 = vector.load %arg4[%c0_7, %c0_8, %c0_9] : memref<2x8x16xf32, #tpu.memory_space<vmem>>, vector<1x8x16xf32>
    %20 = vector.shape_cast %19 : vector<1x8x16xf32> to vector<8x16xf32>
    %21 = vector.shape_cast %18 : vector<8x16xf32> to vector<1x8x16xf32>
    tpu.vector_store %arg4[%c0_7, %c0_8, %c0_9], %21 {strides = array<i32>} : memref<2x8x16xf32, #tpu.memory_space<vmem>>, vector<1x8x16xf32>,
    %c1 = arith.constant 1 : index
    %c0_10 = arith.constant 0 : index
    %c0_11 = arith.constant 0 : index
    %22 = vector.load %arg1[%c1, %c0_10, %c0_11] : memref<2x4x18xf32, #tpu.memory_space<vmem>>, vector<1x4x18xf32>
    %23 = vector.shape_cast %22 : vector<1x4x18xf32> to vector<4x18xf32>
    %24 = vector.extract_strided_slice %23 {offsets = [0, 0], sizes = [4, 16], strides = [1, 1]} : vector<4x18xf32> to vector<4x16xf32>
    %25 = vector.extract_strided_slice %23 {offsets = [0, 1], sizes = [4, 16], strides = [1, 1]} : vector<4x18xf32> to vector<4x16xf32>
    %26 = vector.extract_strided_slice %23 {offsets = [0, 2], sizes = [4, 16], strides = [1, 1]} : vector<4x18xf32> to vector<4x16xf32>
    %27 = tpu.concatenate %24, %25, %26 in 0 : vector<4x16xf32>, vector<4x16xf32>, vector<4x16xf32> -> vector<12x16xf32>
    %cst_12 = arith.constant dense<0.000000e+00> : vector<16x16xf32>
    %28 = tpu.matmul %0, %27, %cst_12 {dimension_numbers = #tpu.dot_dimension_numbers<[1], [0], [0], [1], [0, 0, 1, 1], [], []>} : vector<16x12xf32>, vector<12x16xf32>, vector<16x16xf32> -> vector<16x16xf32>
    %29 = vector.broadcast %1 : vector<16x1xf32> to vector<16x16xf32>
    %30 = arith.addf %28, %29 : vector<16x16xf32>
    %31 = vector.extract_strided_slice %30 {offsets = [0, 0], sizes = [8, 16], strides = [1, 1]} : vector<16x16xf32> to vector<8x16xf32>
    %32 = vector.extract_strided_slice %30 {offsets = [8, 0], sizes = [8, 16], strides = [1, 1]} : vector<16x16xf32> to vector<8x16xf32>
    %33 = arith.negf %32 : vector<8x16xf32>
    %34 = math.exp %33 : vector<8x16xf32>
    %cst_13 = arith.constant 1.000000e+00 : f32
    %35 = vector.broadcast %cst_13 : f32 to vector<8x16xf32>
    %36 = arith.addf %35, %34 : vector<8x16xf32>
    %37 = arith.divf %35, %36 : vector<8x16xf32>
    %38 = arith.mulf %31, %37 : vector<8x16xf32>
    %c1_14 = arith.constant 1 : index
    %c0_15 = arith.constant 0 : index
    %c0_16 = arith.constant 0 : index
    %39 = vector.load %arg4[%c1_14, %c0_15, %c0_16] : memref<2x8x16xf32, #tpu.memory_space<vmem>>, vector<1x8x16xf32>
    %40 = vector.shape_cast %39 : vector<1x8x16xf32> to vector<8x16xf32>
    %41 = vector.shape_cast %38 : vector<8x16xf32> to vector<1x8x16xf32>
    tpu.vector_store %arg4[%c1_14, %c0_15, %c0_16], %41 {strides = array<i32>} : memref<2x8x16xf32, #tpu.memory_space<vmem>>, vector<1x8x16xf32>,
    return
  }
  func.func @transform_0(%arg0: i32) -> (i32, i32, i32) {
    %c0_i32 = arith.constant 0 : i32
    %c0_i32_0 = arith.constant 0 : i32
    %c0_i32_1 = arith.constant 0 : i32
    return %arg0, %c0_i32, %c0_i32_0 : i32, i32, i32
  }
  func.func @transform_1(%arg0: i32) -> (i32, i32) {
    %c0_i32 = arith.constant 0 : i32
    %c0_i32_0 = arith.constant 0 : i32
    %c0_i32_1 = arith.constant 0 : i32
    return %c0_i32, %c0_i32_0 : i32, i32
  }
  func.func @transform_2(%arg0: i32) -> (i32, i32) {
    %c0_i32 = arith.constant 0 : i32
    %c0_i32_0 = arith.constant 0 : i32
    %c0_i32_1 = arith.constant 0 : i32
    return %c0_i32, %c0_i32_0 : i32, i32
  }
  func.func @transform_3(%arg0: i32) -> (i32, i32, i32) {
    %c0_i32 = arith.constant 0 : i32
    %c0_i32_0 = arith.constant 0 : i32
    %c0_i32_1 = arith.constant 0 : i32
    return %arg0, %c0_i32, %c0_i32_0 : i32, i32, i32
  }
}

</mosaic_0001>

<llo_original>
// kernel: tpu_custom_call.1
$region0: #{tpu_custom_call.1}
  #allocation0 [shape = 'u32[]', space=smem, size = 0x4, offset = 0x4, fixed_abs, tag = 'smem constant byte address 0x4 - core index']
  #allocation1 [shape = 'u32[144,128]{1,0:T(1,128)}', space=vmem, size = 0x12000, scoped, tag = 'internal scratch']
  %s0 = inlined_call_operand.hbm [shape: f32[2,4,18], index: 0, kind: input, shape index: {}]
  %s1 = inlined_call_operand.vmem [shape: f32[16,12], index: 1, kind: input, shape index: {}]
  %s2 = inlined_call_operand.vmem [shape: f32[16,1], index: 2, kind: input, shape index: {}]
  %s3 = inlined_call_operand.hbm [shape: f32[2,8,16], index: 3, kind: output, shape index: {}]
  %s4 = sld [smem:[#allocation0]]
  $region26: #{tpu_custom_call.1} parent=0
    _
  %s6 = ssub.s32 1, %s4
  %s7 = scalar_select 0, %s6, %s4
  $region1: #{tpu_custom_call.1} parent=0
    #allocation2 [shape = 'u8[4096]{0}', space=vmem, size = 0x1000, scoped, tag = 'input window, operand 0, single buffered']
    #allocation3 [shape = 's32[1]{0}', space=sflag, size = 0x4, scoped, tag = 'scoped memory for tpu_custom_call.1']
    #allocation4 [shape = 's32[1]{0}', space=sflag, size = 0x4, scoped, tag = 'scoped memory for tpu_custom_call.1']
    #allocation5 [shape = 'u8[8192]{0}', space=vmem, size = 0x2000, scoped, tag = 'output window, operand 0, single buffered']
    %8 = vsyncpa [#allocation3], 0
    %9 = vsyncpa [#allocation4], 0
    // Predicated region
    $region2: #{tpu_custom_call.1} parent=1 // pred_check
      _
    $region3: #{tpu_custom_call.1} parent=1 // pred_check_branch
      %11 = sbr.rel (0) target = $region5
    $region4: #{tpu_custom_call.1} parent=1 // pred_region
      %s13 = ssub.s32 128, 128
      %14 = vsyncadd [#allocation3], %s13
      %s15 = sshll.u32 [#allocation2], 4
      %s16 = int_to_ptr.vmem [resolvable:$true] %s15
      %21 = dma.hbm_to_vmem [thread:$0]  %s0, 128, %s16, [#allocation3], 64, 64, 4
    $region5: #{tpu_custom_call.1} parent=1 // pred_fallthru
      _
    // Predicated region
    $region6: #{tpu_custom_call.1} parent=1 // pred_check
      _
    $region7: #{tpu_custom_call.1} parent=1 // pred_check_branch
      %23 = sbr.rel (0) target = $region9
    $region8: #{tpu_custom_call.1} parent=1 // pred_region
      _
    $region9: #{tpu_custom_call.1} parent=1 // pred_fallthru
      _
    // Predicated region
    $region10: #{tpu_custom_call.1} parent=1 // pred_check
      _
    $region11: #{tpu_custom_call.1} parent=1 // pred_check_branch
      %25 = sbr.rel (0) target = $region13
    $region12: #{tpu_custom_call.1} parent=1 // pred_region
      _
    $region13: #{tpu_custom_call.1} parent=1 // pred_fallthru
      _
    // Predicated region
    $region14: #{tpu_custom_call.1} parent=1 // pred_check
      _
    $region15: #{tpu_custom_call.1} parent=1 // pred_check_branch
      %27 = sbr.rel (0) target = $region17
    $region16: #{tpu_custom_call.1} parent=1 // pred_region
      %28 = dma.done [#allocation3], 128
    $region17: #{tpu_custom_call.1} parent=1 // pred_fallthru
      _
    %v29 = vld [vmem:[%s1] sm:$0xff]
    %v30 = vld [vmem:[%s1 + $0x8] sm:$0xff]
    %v31 = vld [vmem:[%s2] sm:$0xff]
    %v32 = vld [vmem:[%s2 + $0x8] sm:$0xff]
    %v33 = vld [vmem:[#allocation2] sm:$0xf]
    %v35 = vrot.slane %v33, 4
    %36 = vrot.lane.b32.xlu0 %v35, 127
    %v37 = vpop.permute.xlu0 %36
    %39 = vrot.lane.b32.xlu0 %v33, 126
    %v40 = vpop.permute.xlu0 %39
    %vm41 = vcmask 1043456
    %v42 = vsel %vm41, %v33, %v37
    %44 = vset.pattern.permute.xlu0 0
    %45 = vperm.xlu0 %44, %v31
    %v46 = vpop.permute.xlu0 %45
    %49 = vset.pattern.permute.xlu0 0
    %50 = vperm.xlu0 %49, %v32
    %v51 = vpop.permute.xlu0 %50
    %vm53 = vcmask 97280
    %v55 = vsel %vm53, %v29, 0
    %v58 = vsel %vm53, %v30, 0
    %v60 = vsel %vm41, %v40, 0
    %62 = vmatprep.subr.mxu0 0.0
    %63 = vmatpush1.msra.mxu0 %v42
    %64 = vmatprep.subr.mxu0 0.0
    %65 = vmatpush1.msra.mxu0 %v60
    %66 = vmatprep.subr.mxu0 0.0
    %67 = vmatpush1.msra.mxu0 0.0
    %68 = vmatprep.subr.mxu0 0.0
    %69 = vmatpush1.msra.mxu0 0.0
    %70 = vmatprep.subr.mxu0 0.0
    %71 = vmatpush1.msra.mxu0 0.0
    %72 = vmatprep.subr.mxu0 0.0
    %73 = vmatpush1.msra.mxu0 0.0
    %74 = vmatprep.subr.mxu0 0.0
    %75 = vmatpush1.msra.mxu0 0.0
    %76 = vmatprep.subr.mxu0 0.0
    %77 = vmatpush1.msra.mxu0 0.0
    %78 = vmatprep.subr.mxu0 0.0
    %79 = vmatpush1.msra.mxu0 0.0
    %80 = vmatprep.subr.mxu0 0.0
    %81 = vmatpush1.msra.mxu0 0.0
    %82 = vmatprep.subr.mxu0 0.0
    %83 = vmatpush1.msra.mxu0 0.0
    %84 = vmatprep.subr.mxu0 0.0
    %85 = vmatpush1.msra.mxu0 0.0
    %86 = vmatprep.subr.mxu0 0.0
    %87 = vmatpush1.msra.mxu0 0.0
    %88 = vmatprep.subr.mxu0 0.0
    %89 = vmatpush1.msra.mxu0 0.0
    %90 = vmatprep.subr.mxu0 0.0
    %91 = vmatpush1.msra.mxu0 0.0
    %92 = vmatprep.subr.mxu0 0.0
    %93 = vmatpush1.msra.mxu0 0.0
    %94 = vmatprep.subr.mxu0 0.0
    %95 = vmatpush1.msra.mxu0 0.0
    %96 = vmatprep.subr.mxu0 0.0
    %97 = vmatpush1.msra.mxu0 0.0
    %98 = vmatprep.subr.mxu0 0.0
    %99 = vmatpush1.msra.mxu0 0.0
    %100 = vmatprep.subr.mxu0 0.0
    %101 = vmatpush1.msra.mxu0 0.0
    %102 = vmatprep.subr.mxu0 0.0
    %103 = vmatpush1.msra.mxu0 0.0
    %104 = vmatprep.subr.mxu0 0.0
    %105 = vmatpush1.msra.mxu0 0.0
    %106 = vmatprep.subr.mxu0 0.0
    %107 = vmatpush1.msra.mxu0 0.0
    %108 = vmatprep.subr.mxu0 0.0
    %109 = vmatpush1.msra.mxu0 0.0
    %110 = vmatprep.subr.mxu0 0.0
    %111 = vmatpush1.msra.mxu0 0.0
    %112 = vmatprep.subr.mxu0 0.0
    %113 = vmatpush1.msra.mxu0 0.0
    %114 = vmatprep.subr.mxu0 0.0
    %115 = vmatpush1.msra.mxu0 0.0
    %116 = vmatprep.subr.mxu0 0.0
    %117 = vmatpush1.msra.mxu0 0.0
    %118 = vmatprep.subr.mxu0 0.0
    %119 = vmatpush1.msra.mxu0 0.0
    %120 = vmatprep.subr.mxu0 0.0
    %121 = vmatpush1.msra.mxu0 0.0
    %122 = vmatprep.subr.mxu0 0.0
    %123 = vmatpush1.msra.mxu0 0.0
    %124 = vmatprep.subr.mxu0 0.0
    %125 = vmatpush1.msra.mxu0 0.0
    %126 = vmatprep.mubr.f32.mxu0 0.0
    %127 = vmatmul.mubr.f32.gmra.mrb[0].mxu0 %v55
    %v128 = vpop.f32.mrb[0].mxu0
    %v129 = vadd.f32 %v46, %v128
    %v130 = vpop.f32.mrb[0].mxu0
    %131 = vmatprep.mubr.f32.mxu0 0.0
    %132 = vmatmul.mubr.f32.gmra.mrb[0].mxu0 %v58
    %v133 = vpop.f32.mrb[0].mxu0
    %v134 = vadd.f32 %v51, %v133
    %v135 = vpop.f32.mrb[0].mxu0
    %136 = vdwg.mxu0
    %v137 = vxor.u32 %v134, 2147483648
    %v138 = vmul.f32 %v137, 1.442695
    %v139 = vpow.pop %v138
    %v140 = vadd.f32 %v139, 1.0
    %v141 = vrcp.pop %v140
    %v142 = vmul.f32 1.0, %v141
    %v143 = vmul.f32 %v129, %v142
    %vm144 = vcmask 130048
    %145 = vst.msk [vmem:[#allocation5] sm:$0xff] %vm144, %v143
    %s146 = scalar_lea.vmem [#allocation2], 4
    %v147 = vld [vmem:[%s146] sm:$0xf]
    %v149 = vrot.slane %v147, 4
    %150 = vrot.lane.b32.xlu0 %v149, 127
    %v151 = vpop.permute.xlu0 %150
    %153 = vrot.lane.b32.xlu0 %v147, 126
    %v154 = vpop.permute.xlu0 %153
    %v155 = vsel %vm41, %v147, %v151
    %v156 = vsel %vm41, %v154, 0
    %158 = vmatprep.subr.mxu0 0.0
    %159 = vmatpush1.msra.mxu0 %v155
    %160 = vmatprep.subr.mxu0 0.0
    %161 = vmatpush1.msra.mxu0 %v156
    %162 = vmatprep.subr.mxu0 0.0
    %163 = vmatpush1.msra.mxu0 0.0
    %164 = vmatprep.subr.mxu0 0.0
    %165 = vmatpush1.msra.mxu0 0.0
    %166 = vmatprep.subr.mxu0 0.0
    %167 = vmatpush1.msra.mxu0 0.0
    %168 = vmatprep.subr.mxu0 0.0
    %169 = vmatpush1.msra.mxu0 0.0
    %170 = vmatprep.subr.mxu0 0.0
    %171 = vmatpush1.msra.mxu0 0.0
    %172 = vmatprep.subr.mxu0 0.0
    %173 = vmatpush1.msra.mxu0 0.0
    %174 = vmatprep.subr.mxu0 0.0
    %175 = vmatpush1.msra.mxu0 0.0
    %176 = vmatprep.subr.mxu0 0.0
    %177 = vmatpush1.msra.mxu0 0.0
    %178 = vmatprep.subr.mxu0 0.0
    %179 = vmatpush1.msra.mxu0 0.0
    %180 = vmatprep.subr.mxu0 0.0
    %181 = vmatpush1.msra.mxu0 0.0
    %182 = vmatprep.subr.mxu0 0.0
    %183 = vmatpush1.msra.mxu0 0.0
    %184 = vmatprep.subr.mxu0 0.0
    %185 = vmatpush1.msra.mxu0 0.0
    %186 = vmatprep.subr.mxu0 0.0
    %187 = vmatpush1.msra.mxu0 0.0
    %188 = vmatprep.subr.mxu0 0.0
    %189 = vmatpush1.msra.mxu0 0.0
    %190 = vmatprep.subr.mxu0 0.0
    %191 = vmatpush1.msra.mxu0 0.0
    %192 = vmatprep.subr.mxu0 0.0
    %193 = vmatpush1.msra.mxu0 0.0
    %194 = vmatprep.subr.mxu0 0.0
    %195 = vmatpush1.msra.mxu0 0.0
    %196 = vmatprep.subr.mxu0 0.0
    %197 = vmatpush1.msra.mxu0 0.0
    %198 = vmatprep.subr.mxu0 0.0
    %199 = vmatpush1.msra.mxu0 0.0
    %200 = vmatprep.subr.mxu0 0.0
    %201 = vmatpush1.msra.mxu0 0.0
    %202 = vmatprep.subr.mxu0 0.0
    %203 = vmatpush1.msra.mxu0 0.0
    %204 = vmatprep.subr.mxu0 0.0
    %205 = vmatpush1.msra.mxu0 0.0
    %206 = vmatprep.subr.mxu0 0.0
    %207 = vmatpush1.msra.mxu0 0.0
    %208 = vmatprep.subr.mxu0 0.0
    %209 = vmatpush1.msra.mxu0 0.0
    %210 = vmatprep.subr.mxu0 0.0
    %211 = vmatpush1.msra.mxu0 0.0
    %212 = vmatprep.subr.mxu0 0.0
    %213 = vmatpush1.msra.mxu0 0.0
    %214 = vmatprep.subr.mxu0 0.0
    %215 = vmatpush1.msra.mxu0 0.0
    %216 = vmatprep.subr.mxu0 0.0
    %217 = vmatpush1.msra.mxu0 0.0
    %218 = vmatprep.subr.mxu0 0.0
    %219 = vmatpush1.msra.mxu0 0.0
    %220 = vmatprep.subr.mxu0 0.0
    %221 = vmatpush1.msra.mxu0 0.0
    %222 = vmatprep.mubr.f32.mxu0 0.0
    %223 = vmatmul.mubr.f32.gmra.mrb[0].mxu0 %v55
    %v224 = vpop.f32.mrb[0].mxu0
    %v225 = vadd.f32 %v46, %v224
    %v226 = vpop.f32.mrb[0].mxu0
    %227 = vmatprep.mubr.f32.mxu0 0.0
    %228 = vmatmul.mubr.f32.gmra.mrb[0].mxu0 %v58
    %v229 = vpop.f32.mrb[0].mxu0
    %v230 = vadd.f32 %v51, %v229
    %v231 = vpop.f32.mrb[0].mxu0
    %232 = vdwg.mxu0
    %v233 = vxor.u32 %v230, 2147483648
    %v234 = vmul.f32 %v233, 1.442695
    %v235 = vpow.pop %v234
    %v236 = vadd.f32 %v235, 1.0
    %v237 = vrcp.pop %v236
    %v238 = vmul.f32 1.0, %v237
    %v239 = vmul.f32 %v225, %v238
    %s240 = scalar_lea.vmem [#allocation5], 8
    %241 = vst.msk [vmem:[%s240] sm:$0xff] %vm144, %v239
    // Predicated region
    $region18: #{tpu_custom_call.1} parent=1 // pred_check
      _
    $region19: #{tpu_custom_call.1} parent=1 // pred_check_branch
      %243 = sbr.rel (0) target = $region21
    $region20: #{tpu_custom_call.1} parent=1 // pred_region
      %s245 = ssub.s32 256, 256
      %246 = vsyncadd [#allocation4], %s245
      %s247 = sshll.u32 [#allocation5], 4
      %s248 = int_to_ptr.vmem [resolvable:$true] %s247
      %253 = dma.vmem_to_hbm [thread:$0]  %s248, 256, %s3, [#allocation4], 128, 128, 8
    $region21: #{tpu_custom_call.1} parent=1 // pred_fallthru
      _
    // Predicated region
    $region22: #{tpu_custom_call.1} parent=1 // pred_check
      _
    $region23: #{tpu_custom_call.1} parent=1 // pred_check_branch
      %255 = sbr.rel (0) target = $region25
    $region24: #{tpu_custom_call.1} parent=1 // pred_region
      %256 = dma.done [#allocation4], 256
    $region25: #{tpu_custom_call.1} parent=1 // pred_fallthru
      _
    %257 = vsyncpa [#allocation3], 1
    %258 = vsyncpa [#allocation4], 1

</llo_original>
